<compile_context>
chip_gen: v6e
topology: v6e:2x2x1
jax: 0.10.0
libtpu: 0.0.40
codegen_flags: <defaults>
</compile_context>

<pallas_src>
import jax
import jax.numpy as jnp
from jax.experimental import pallas as pl
from jax.experimental.pallas import tpu as pltpu

_LANE = 128
_MAX_TILE_ROWS = 1024          # (1024, 128) f32 block = 512 KiB; temps ~2-3 MiB
_ROW_ALIGN = 16                # keeps each half-tile a multiple of 8 sublanes


def _mix32(x):
    """murmur3-style 32-bit finalizer (good avalanche on counter inputs)."""
    x = x ^ (x >> 16)
    x = x * jnp.uint32(0x85EBCA6B)
    x = x ^ (x >> 13)
    x = x * jnp.uint32(0xC2B2AE35)
    x = x ^ (x >> 16)
    return x


def _uniform01(bits_u32):
    """uint32 bits -> float32 uniform in [0, 1) via exponent bit-trick."""
    f = jax.lax.bitcast_convert_type(
        (bits_u32 >> 9) | jnp.uint32(0x3F800000), jnp.float32)
    return f - jnp.float32(1.0)


def _gen_noise_kernel(seed_ref, o_ref):
    """Fill one (TILE_ROWS, 128) output block with standard-normal samples.

    Counter-based PRNG + full Box-Muller (both branches): the first half of
    the tile gets r*cos(theta), the second half r*sin(theta).
    """
    tile_rows = o_ref.shape[0]
    half = tile_rows // 2
    half_elems = half * _LANE

    # Per-pair global counter: unique across tiles (and across megacore shards).
    pid = pl.program_id(0)
    base = pid * half_elems                                  # int32 scalar
    row = jax.lax.broadcasted_iota(jnp.int32, (half, _LANE), 0)
    lane = jax.lax.broadcasted_iota(jnp.int32, (half, _LANE), 1)
    c = (base + row * _LANE + lane).astype(jnp.uint32)

    seed_u = seed_ref[0].astype(jnp.uint32)

    # Two independent 32-bit streams (splitmix-style: Weyl step + finalizer).
    bits1 = _mix32((c * jnp.uint32(0x9E3779B9)) ^ seed_u)
    bits2 = _mix32((c * jnp.uint32(0xBB67AE85) + jnp.uint32(0x7F4A7C15)) ^ seed_u)

    u1 = jnp.float32(1.0) - _uniform01(bits1)                # (0, 1]  (log-safe)
    u2 = _uniform01(bits2)                                   # [0, 1)

    r = jnp.sqrt(jnp.float32(-2.0) * jnp.log(u1))
    theta = jnp.float32(2.0 * jnp.pi) * u2

    o_ref[0:half, :] = (r * jnp.cos(theta)).astype(o_ref.dtype)
    o_ref[half:, :] = (r * jnp.sin(theta)).astype(o_ref.dtype)


def gen_noise(x, dim2, seed=0):
    """Pallas equivalent of GenNoise(dim2)(x): N(0,1) noise, shape (N, dim2, H, W)."""
    N, C, H, W = x.shape
    total = N * dim2 * H * W

    # Lane-dense slab: rows x 128, rows padded so each tile splits into two
    # sublane-aligned halves.
    rows = pl.cdiv(total, _LANE)
    rows_pad = pl.cdiv(rows, _ROW_ALIGN) * _ROW_ALIGN
    tile_rows = min(_MAX_TILE_ROWS, rows_pad)
    num_tiles = pl.cdiv(rows_pad, tile_rows)
    rows_slab = num_tiles * tile_rows

    out_bytes = rows_slab * _LANE * jnp.dtype(x.dtype).itemsize
    cost = pl.CostEstimate(
        flops=30 * rows_slab * _LANE,            # int mixing + Box-Muller arith
        transcendentals=2 * rows_slab * _LANE,   # log+sqrt+cos+sin per 2 outputs
        bytes_accessed=out_bytes,
    )

    slab = pl.pallas_call(
        _gen_noise_kernel,
        out_shape=jax.ShapeDtypeStruct((rows_slab, _LANE), x.dtype),
        grid_spec=pltpu.PrefetchScalarGridSpec(
            num_scalar_prefetch=1,               # seed lands in SMEM
            grid=(num_tiles,),
            in_specs=[],
            out_specs=pl.BlockSpec((tile_rows, _LANE), lambda i, seed_ref: (i, 0)),
        ),
        compiler_params=pltpu.CompilerParams(
            dimension_semantics=("parallel",),   # megacore sharding on v7x
        ),
        cost_estimate=cost,
    )(jnp.array([seed], dtype=jnp.int32))

    if rows_slab * _LANE == total:
        # Exact fit: metadata-only reshape, no extra HBM copy.
        return slab.reshape(N, dim2, H, W)
    # Padded case: slice then reshape (one extra copy, only when unavoidable).
    return slab.reshape(-1)[:total].reshape(N, dim2, H, W)


if __name__ == "__main__":
    key = jax.random.PRNGKey(0)
    # Small NCHW input consistent with a conv feature map.
    x = jax.random.normal(key, (2, 4, 16, 16), dtype=jnp.float32)

    dim2 = 8  # GenNoise(dim2=8): output channel count replaces C
    out = gen_noise(x, dim2, seed=0)
    out = jax.block_until_ready(out)

    assert out.shape == (2, dim2, 16, 16), out.shape
    assert out.dtype == x.dtype, out.dtype
    # Sanity: roughly standard-normal statistics over 4096 samples.
    m = float(jnp.mean(out))
    s = float(jnp.std(out))
    assert abs(m) < 0.2 and 0.8 < s < 1.2, (m, s)

    print("KERNEL_OK")
</pallas_src>

<mosaic_0001>
module attributes {stable_mosaic.version = 11 : i64} {
  func.func @_gen_noise_kernel(%arg0: i32, %arg1: memref<1xi32, #tpu.memory_space<smem>>, %arg2: memref<32x128xf32, #tpu.memory_space<vmem>>) attributes {dimension_semantics = [#tpu.dimension_semantics<parallel>], iteration_bounds = array<i64: 1>, scalar_prefetch = 1 : i64, scratch_operands = 0 : i64, tpu.core_type = #tpu.core_type<tc>, window_params = [{transform_indices = @transform_0, window_bounds = array<i64: 32, 128>}]} {
    %c2048_i32 = arith.constant 2048 : i32
    %0 = arith.muli %arg0, %c2048_i32 : i32
    %1 = tpu.iota {dimensions = array<i32: 0>} : vector<16x128xi32>
    %2 = tpu.iota {dimensions = array<i32: 1>} : vector<16x128xi32>
    %c128_i32 = arith.constant 128 : i32
    %3 = vector.broadcast %c128_i32 : i32 to vector<16x128xi32>
    %4 = arith.muli %1, %3 : vector<16x128xi32>
    %5 = vector.broadcast %0 : i32 to vector<16x128xi32>
    %6 = arith.addi %5, %4 : vector<16x128xi32>
    %7 = arith.addi %6, %2 : vector<16x128xi32>
    %c0 = arith.constant 0 : index
    %8 = memref.load %arg1[%c0] : memref<1xi32, #tpu.memory_space<smem>>
    %c-1640531527_i32 = arith.constant -1640531527 : i32
    %9 = vector.broadcast %c-1640531527_i32 : i32 to vector<16x128xi32>
    %10 = arith.muli %7, %9 : vector<16x128xi32>
    %11 = vector.broadcast %8 : i32 to vector<16x128xi32>
    %12 = arith.xori %10, %11 : vector<16x128xi32>
    %c16_i32 = arith.constant 16 : i32
    %13 = vector.broadcast %c16_i32 : i32 to vector<16x128xi32>
    %14 = arith.shrui %12, %13 : vector<16x128xi32>
    %15 = arith.xori %12, %14 : vector<16x128xi32>
    %c-2048144789_i32 = arith.constant -2048144789 : i32
    %16 = vector.broadcast %c-2048144789_i32 : i32 to vector<16x128xi32>
    %17 = arith.muli %15, %16 : vector<16x128xi32>
    %c13_i32 = arith.constant 13 : i32
    %18 = vector.broadcast %c13_i32 : i32 to vector<16x128xi32>
    %19 = arith.shrui %17, %18 : vector<16x128xi32>
    %20 = arith.xori %17, %19 : vector<16x128xi32>
    %c-1028477387_i32 = arith.constant -1028477387 : i32
    %21 = vector.broadcast %c-1028477387_i32 : i32 to vector<16x128xi32>
    %22 = arith.muli %20, %21 : vector<16x128xi32>
    %c16_i32_0 = arith.constant 16 : i32
    %23 = vector.broadcast %c16_i32_0 : i32 to vector<16x128xi32>
    %24 = arith.shrui %22, %23 : vector<16x128xi32>
    %25 = arith.xori %22, %24 : vector<16x128xi32>
    %c-1150833019_i32 = arith.constant -1150833019 : i32
    %26 = vector.broadcast %c-1150833019_i32 : i32 to vector<16x128xi32>
    %27 = arith.muli %7, %26 : vector<16x128xi32>
    %c2135587861_i32 = arith.constant 2135587861 : i32
    %28 = vector.broadcast %c2135587861_i32 : i32 to vector<16x128xi32>
    %29 = arith.addi %27, %28 : vector<16x128xi32>
    %30 = vector.broadcast %8 : i32 to vector<16x128xi32>
    %31 = arith.xori %29, %30 : vector<16x128xi32>
    %c16_i32_1 = arith.constant 16 : i32
    %32 = vector.broadcast %c16_i32_1 : i32 to vector<16x128xi32>
    %33 = arith.shrui %31, %32 : vector<16x128xi32>
    %34 = arith.xori %31, %33 : vector<16x128xi32>
    %c-2048144789_i32_2 = arith.constant -2048144789 : i32
    %35 = vector.broadcast %c-2048144789_i32_2 : i32 to vector<16x128xi32>
    %36 = arith.muli %34, %35 : vector<16x128xi32>
    %c13_i32_3 = arith.constant 13 : i32
    %37 = vector.broadcast %c13_i32_3 : i32 to vector<16x128xi32>
    %38 = arith.shrui %36, %37 : vector<16x128xi32>
    %39 = arith.xori %36, %38 : vector<16x128xi32>
    %c-1028477387_i32_4 = arith.constant -1028477387 : i32
    %40 = vector.broadcast %c-1028477387_i32_4 : i32 to vector<16x128xi32>
    %41 = arith.muli %39, %40 : vector<16x128xi32>
    %c16_i32_5 = arith.constant 16 : i32
    %42 = vector.broadcast %c16_i32_5 : i32 to vector<16x128xi32>
    %43 = arith.shrui %41, %42 : vector<16x128xi32>
    %44 = arith.xori %41, %43 : vector<16x128xi32>
    %c9_i32 = arith.constant 9 : i32
    %45 = vector.broadcast %c9_i32 : i32 to vector<16x128xi32>
    %46 = arith.shrui %25, %45 : vector<16x128xi32>
    %c1065353216_i32 = arith.constant 1065353216 : i32
    %47 = vector.broadcast %c1065353216_i32 : i32 to vector<16x128xi32>
    %48 = arith.ori %46, %47 : vector<16x128xi32>
    %49 = tpu.bitcast %48 : vector<16x128xi32> -> vector<16x128xf32>
    %cst = arith.constant 1.000000e+00 : f32
    %50 = vector.broadcast %cst : f32 to vector<16x128xf32>
    %51 = arith.subf %49, %50 : vector<16x128xf32>
    %cst_6 = arith.constant 1.000000e+00 : f32
    %52 = vector.broadcast %cst_6 : f32 to vector<16x128xf32>
    %53 = arith.subf %52, %51 : vector<16x128xf32>
    %c9_i32_7 = arith.constant 9 : i32
    %54 = vector.broadcast %c9_i32_7 : i32 to vector<16x128xi32>
    %55 = arith.shrui %44, %54 : vector<16x128xi32>
    %c1065353216_i32_8 = arith.constant 1065353216 : i32
    %56 = vector.broadcast %c1065353216_i32_8 : i32 to vector<16x128xi32>
    %57 = arith.ori %55, %56 : vector<16x128xi32>
    %58 = tpu.bitcast %57 : vector<16x128xi32> -> vector<16x128xf32>
    %cst_9 = arith.constant 1.000000e+00 : f32
    %59 = vector.broadcast %cst_9 : f32 to vector<16x128xf32>
    %60 = arith.subf %58, %59 : vector<16x128xf32>
    %61 = math.log %53 : vector<16x128xf32>
    %cst_10 = arith.constant -2.000000e+00 : f32
    %62 = vector.broadcast %cst_10 : f32 to vector<16x128xf32>
    %63 = arith.mulf %62, %61 : vector<16x128xf32>
    %64 = math.sqrt %63 : vector<16x128xf32>
    %cst_11 = arith.constant 6.28318548 : f32
    %65 = vector.broadcast %cst_11 : f32 to vector<16x128xf32>
    %66 = arith.mulf %65, %60 : vector<16x128xf32>
    %67 = math.cos %66 : vector<16x128xf32>
    %68 = arith.mulf %64, %67 : vector<16x128xf32>
    %c0_12 = arith.constant 0 : index
    %c0_13 = arith.constant 0 : index
    %69 = vector.load %arg2[%c0_12, %c0_13] : memref<32x128xf32, #tpu.memory_space<vmem>>, vector<16x128xf32>
    tpu.vector_store %arg2[%c0_12, %c0_13], %68 {strides = array<i32>} : memref<32x128xf32, #tpu.memory_space<vmem>>, vector<16x128xf32>,
    %70 = math.sin %66 : vector<16x128xf32>
    %71 = arith.mulf %64, %70 : vector<16x128xf32>
    %c16 = arith.constant 16 : index
    %c0_14 = arith.constant 0 : index
    %72 = vector.load %arg2[%c16, %c0_14] : memref<32x128xf32, #tpu.memory_space<vmem>>, vector<16x128xf32>
    tpu.vector_store %arg2[%c16, %c0_14], %71 {strides = array<i32>} : memref<32x128xf32, #tpu.memory_space<vmem>>, vector<16x128xf32>,
    return
  }
  func.func @transform_0(%arg0: i32, %arg1: memref<1xi32, #tpu.memory_space<smem>>) -> (i32, i32) {
    %c0_i32 = arith.constant 0 : i32
    %c0_i32_0 = arith.constant 0 : i32
    return %arg0, %c0_i32 : i32, i32
  }
}

</mosaic_0001>

<llo_original>
// kernel: tpu_custom_call.1
$region0: #{tpu_custom_call.1}
  #allocation0 [shape = 'u32[]', space=smem, size = 0x4, offset = 0x4, fixed_abs, tag = 'smem constant byte address 0x4 - core index']
  #allocation1 [shape = 'u32[144,128]{1,0:T(1,128)}', space=vmem, size = 0x12000, scoped, tag = 'internal scratch']
  #allocation2 [shape = 's32[1]{0}', space=sflag, size = 0x4, scoped, tag = 'scoped memory for tpu_custom_call.1']
  #allocation3 [shape = 's32[1]{0:T(128)S(6)}', space=smem, size = 0x200, scoped, tag = 'prefetched SMEM operand 0']
  %s0 = inlined_call_operand.<no memory space> [shape: s32[1], index: 0, kind: input, shape index: {}]
  %s1 = inlined_call_operand.hbm [shape: f32[32,128], index: 1, kind: output, shape index: {}]
  %s2 = sld [smem:[#allocation0]]
  $region10: #{tpu_custom_call.1} parent=0
    _
  %s4 = ssub.s32 1, %s2
  %s5 = scalar_select 0, %s4, %s2
  %6 = sst [smem:[#allocation3]] %s0
  $region1: #{tpu_custom_call.1} parent=0
    #allocation4 [shape = 'u8[16384]{0}', space=vmem, size = 0x4000, scoped, tag = 'output window, operand 0, single buffered']
    #allocation5 [shape = 's32[1]{0}', space=sflag, size = 0x4, scoped, tag = 'scoped memory for tpu_custom_call.1']
    %7 = vsyncpa [#allocation5], 0
    %s8 = smul.u32 0, 2048
    %v9 = vlaneseq
    %v10 = vshrl.u32 %v9, 7
    %v11 = vadd.s32 %v10, 8
    %v12 = vlaneseq
    %v13 = vand.u32 %v12, 127
    %v14 = vmul.u32 %v10, 128
    %v15 = vmul.u32 %v11, 128
    %v16 = vstv %s8
    %v17 = vadd.s32 %v16, %v14
    %v18 = vadd.s32 %v16, %v15
    %v19 = vadd.s32 %v17, %v13
    %v20 = vadd.s32 %v18, %v13
    %s21 = sld [smem:[#allocation3]]
    %v22 = vmul.u32 %v19, 2654435769
    %v23 = vmul.u32 %v20, 2654435769
    %v24 = vstv %s21
    %v25 = vxor.u32 %v22, %v24
    %v26 = vxor.u32 %v23, %v24
    %v27 = vshrl.u32 %v25, 16
    %v28 = vshrl.u32 %v26, 16
    %v29 = vxor.u32 %v25, %v27
    %v30 = vxor.u32 %v26, %v28
    %v31 = vmul.u32 %v29, 2246822507
    %v32 = vmul.u32 %v30, 2246822507
    %v33 = vshrl.u32 %v31, 13
    %v34 = vshrl.u32 %v32, 13
    %v35 = vxor.u32 %v31, %v33
    %v36 = vxor.u32 %v32, %v34
    %v37 = vmul.u32 %v35, 3266489909
    %v38 = vmul.u32 %v36, 3266489909
    %v39 = vshrl.u32 %v37, 16
    %v40 = vshrl.u32 %v38, 16
    %v41 = vxor.u32 %v37, %v39
    %v42 = vxor.u32 %v38, %v40
    %v43 = vmul.u32 %v19, 3144134277
    %v44 = vmul.u32 %v20, 3144134277
    %v45 = vadd.s32 %v43, 2135587861
    %v46 = vadd.s32 %v44, 2135587861
    %v47 = vxor.u32 %v45, %v24
    %v48 = vxor.u32 %v46, %v24
    %v49 = vshrl.u32 %v47, 16
    %v50 = vshrl.u32 %v48, 16
    %v51 = vxor.u32 %v47, %v49
    %v52 = vxor.u32 %v48, %v50
    %v53 = vmul.u32 %v51, 2246822507
    %v54 = vmul.u32 %v52, 2246822507
    %v55 = vshrl.u32 %v53, 13
    %v56 = vshrl.u32 %v54, 13
    %v57 = vxor.u32 %v53, %v55
    %v58 = vxor.u32 %v54, %v56
    %v59 = vmul.u32 %v57, 3266489909
    %v60 = vmul.u32 %v58, 3266489909
    %v61 = vshrl.u32 %v59, 16
    %v62 = vshrl.u32 %v60, 16
    %v63 = vxor.u32 %v59, %v61
    %v64 = vxor.u32 %v60, %v62
    %v65 = vshrl.u32 %v41, 9
    %v66 = vshrl.u32 %v42, 9
    %v67 = vor.u32 %v65, 1065353216
    %v68 = vor.u32 %v66, 1065353216
    %v71 = vsub.f32 %v67, 1.0
    %v72 = vsub.f32 %v68, 1.0
    %v73 = vsub.f32 1.0, %v71
    %v74 = vsub.f32 1.0, %v72
    %v75 = vshrl.u32 %v63, 9
    %v76 = vshrl.u32 %v64, 9
    %v77 = vor.u32 %v75, 1065353216
    %v78 = vor.u32 %v76, 1065353216
    %v81 = vsub.f32 %v77, 1.0
    %v82 = vsub.f32 %v78, 1.0
    %v83 = vlog2.pop %v73
    %v84 = vmul.f32 %v83, 0.6931472
    %v85 = vlog2.pop %v74
    %v86 = vmul.f32 %v85, 0.6931472
    %v87 = vmul.f32 %v84, -2.0
    %v88 = vmul.f32 %v86, -2.0
    %v89 = vrsqrt.pop %v87
    %v90 = vmul.f32 %v87, %v89
    %vm91 = vcmp.eq.f32.partialorder %v87, inf
    %v92 = vsel %vm91, %v87, %v90
    %vm93 = vcmp.eq.f32.partialorder %v87, 0.0
    %v94 = vand.u32 %v87, 2147483648
    %v95 = vsel %vm93, %v94, %v92
    %v96 = vrsqrt.pop %v88
    %v97 = vmul.f32 %v88, %v96
    %vm98 = vcmp.eq.f32.partialorder %v88, inf
    %v99 = vsel %vm98, %v88, %v97
    %vm100 = vcmp.eq.f32.partialorder %v88, 0.0
    %v101 = vand.u32 %v88, 2147483648
    %v102 = vsel %vm100, %v101, %v99
    %v103 = vmul.f32 %v81, 6.2831855
    %v104 = vmul.f32 %v82, 6.2831855
    %v105 = vand.u32 2147483647, %v103
    %vm106 = vcmp.le.f32.partialorder %v105, 0.7853982
    %vm107 = vcmp.lt.s32.totalorder %v103, 0
    %v108 = vand.u32 %v103, 2139095040
    %v109 = vshrl.u32 %v108, 23
    %v110 = vsub.s32 %v109, 127
    %v111 = vand.u32 2147483647, %v103
    %v112 = vand.u32 %v111, 8388607
    %v113 = vor.u32 %v112, 8388608
    %v114 = vsub.s32 0, %v113
    %v115 = vadd.s32 %v110, 1
    %vm116 = vcmp.gt.s32.totalorder %v115, 0
    %v117 = vsel %vm116, %v115, 0
    %v118 = vshrl.u32 %v117, 5
    %v119 = vand.u32 %v117, 31
    %v120 = vsub.s32 32, %v119
    %v121 = vshrl.u32 683565275, %v120
    %v122 = vshll.u32 683565275, %v119
    %v123 = vshrl.u32 2475754826, %v120
    %v124 = vor.u32 %v122, %v123
    %v125 = vshll.u32 2475754826, %v119
    %v126 = vshrl.u32 2131351028, %v120
    %v127 = vor.u32 %v125, %v126
    %v128 = vshll.u32 2131351028, %v119
    %v129 = vshrl.u32 2102212464, %v120
    %v130 = vor.u32 %v128, %v129
    %v131 = vshll.u32 2102212464, %v119
    %v132 = vshrl.u32 920167782, %v120
    %v133 = vor.u32 %v131, %v132
    %v134 = vshll.u32 920167782, %v119
    %v135 = vshrl.u32 1326507024, %v120
    %v136 = vor.u32 %v134, %v135
    %vm137 = vcmp.lt.s32.totalorder %v118, 1
    %vm138 = vcmp.lt.s32.totalorder %v118, 2
    %vm139 = vcmp.lt.s32.totalorder %v118, 3
    %vm140 = vcmp.lt.s32.totalorder %v118, 4
    %v141 = vsel %vm137, %v121, %v124
    %v142 = vsel %vm140, %v130, 2102212464
    %v143 = vsel %vm139, %v127, %v142
    %v144 = vsel %vm138, %v141, %v143
    %v145 = vsel %vm137, %v124, %v127
    %v146 = vsel %vm140, %v133, 920167782
    %v147 = vsel %vm139, %v130, %v146
    %v148 = vsel %vm138, %v145, %v147
    %v149 = vsel %vm137, %v127, %v130
    %v150 = vsel %vm140, %v136, 1326507024
    %v151 = vsel %vm139, %v133, %v150
    %v152 = vsel %vm138, %v149, %v151
    %v153 = vshll.u32 %v113, 8
    %v154 = vmul.u32.u64.compose %v153, %v152
    %v155 = vextract.low.u32 %v154
    %v156 = vextract.high.u32 %v154
    %v157 = vmul.u32.u64.compose %v153, %v148
    %v158 = vextract.low.u32 %v157
    %v159 = vextract.high.u32 %v157
    %v160 = vmul.u32 %v153, %v144
    %v161 = vadd.s32 %v156, %v158
    %vm162 = vc.u32 %v156, %v158
    %v163 = vadd.s32 %v159, 1
    %v164 = vsel %vm162, %v163, %v159
    %v165 = vadd.s32 %v160, %v164
    %v166 = vadd.s32 %v165, 536870912
    %v167 = vshrl.u32 %v166, 30
    %v168 = vshll.u32 %v167, 30
    %v169 = vsub.s32 %v165, %v168
    %vm170 = vcmp.lt.s32.totalorder %v169, 0
    %v171 = vsub.s32 0, %v169
    %v172 = vsel %vm170, %v171, %v169
    %v173 = vclz %v172
    %v174 = vsub.s32 %v173, 2
    %vm175 = vcmp.gt.s32.totalorder 0, %v174
    %v176 = vsel %vm175, 0, %v174
    %v177 = vsub.s32 32, %v176
    %v178 = vshll.u32 %v169, %v176
    %v179 = vshrl.u32 %v161, %v177
    %v180 = vor.u32 %v178, %v179
    %v181 = vsub.s32 4294967266, %v176
    %v182 = vadd.s32 %v181, 127
    %v183 = vshll.u32 %v182, 23
    %v184 = vor.u32 4788187, %v183
    %v185 = vand.u32 2147483647, %v184
    %v187 = vcvt.s32.f32 %v180
    %v188 = vmul.f32 %v187, %v185
    %v189 = vxor.u32 %v188, 2147483648
    %v190 = vsel %vm107, %v189, %v188
    %v191 = vsub.s32 4, %v167
    %v192 = vsel %vm107, %v191, %v167
    %v193 = vsel %vm106, %v103, %v190
    %v194 = vsel %vm106, 0, %v192
    %v195 = vcosq.f32.pop %v193
    %v196 = vsinq.f32.pop %v193
    %vm197 = vweird.f32 %v103
    %v198 = vand.u32 %v194, 3
    %vm199 = vcmp.lt.s32.totalorder %v198, 2
    %vm200 = vcmp.eq.s32.totalorder %v198, 0
    %v201 = vxor.u32 %v196, 2147483648
    %v202 = vsel %vm200, %v195, %v201
    %vm203 = vcmp.eq.s32.totalorder %v198, 2
    %v204 = vxor.u32 %v195, 2147483648
    %v205 = vsel %vm203, %v204, %v196
    %v206 = vsel %vm199, %v202, %v205
    %v207 = vsel %vm197, nan, %v206
    %v208 = vand.u32 2147483647, %v104
    %vm209 = vcmp.le.f32.partialorder %v208, 0.7853982
    %vm210 = vcmp.lt.s32.totalorder %v104, 0
    %v211 = vand.u32 %v104, 2139095040
    %v212 = vshrl.u32 %v211, 23
    %v213 = vsub.s32 %v212, 127
    %v214 = vand.u32 2147483647, %v104
    %v215 = vand.u32 %v214, 8388607
    %v216 = vor.u32 %v215, 8388608
    %v217 = vsub.s32 0, %v216
    %v218 = vadd.s32 %v213, 1
    %vm219 = vcmp.gt.s32.totalorder %v218, 0
    %v220 = vsel %vm219, %v218, 0
    %v221 = vshrl.u32 %v220, 5
    %v222 = vand.u32 %v220, 31
    %v223 = vsub.s32 32, %v222
    %v224 = vshrl.u32 683565275, %v223
    %v225 = vshll.u32 683565275, %v222
    %v226 = vshrl.u32 2475754826, %v223
    %v227 = vor.u32 %v225, %v226
    %v228 = vshll.u32 2475754826, %v222
    %v229 = vshrl.u32 2131351028, %v223
    %v230 = vor.u32 %v228, %v229
    %v231 = vshll.u32 2131351028, %v222
    %v232 = vshrl.u32 2102212464, %v223
    %v233 = vor.u32 %v231, %v232
    %v234 = vshll.u32 2102212464, %v222
    %v235 = vshrl.u32 920167782, %v223
    %v236 = vor.u32 %v234, %v235
    %v237 = vshll.u32 920167782, %v222
    %v238 = vshrl.u32 1326507024, %v223
    %v239 = vor.u32 %v237, %v238
    %vm240 = vcmp.lt.s32.totalorder %v221, 1
    %vm241 = vcmp.lt.s32.totalorder %v221, 2
    %vm242 = vcmp.lt.s32.totalorder %v221, 3
    %vm243 = vcmp.lt.s32.totalorder %v221, 4
    %v244 = vsel %vm240, %v224, %v227
    %v245 = vsel %vm243, %v233, 2102212464
    %v246 = vsel %vm242, %v230, %v245
    %v247 = vsel %vm241, %v244, %v246
    %v248 = vsel %vm240, %v227, %v230
    %v249 = vsel %vm243, %v236, 920167782
    %v250 = vsel %vm242, %v233, %v249
    %v251 = vsel %vm241, %v248, %v250
    %v252 = vsel %vm240, %v230, %v233
    %v253 = vsel %vm243, %v239, 1326507024
    %v254 = vsel %vm242, %v236, %v253
    %v255 = vsel %vm241, %v252, %v254
    %v256 = vshll.u32 %v216, 8
    %v257 = vmul.u32.u64.compose %v256, %v255
    %v258 = vextract.low.u32 %v257
    %v259 = vextract.high.u32 %v257
    %v260 = vmul.u32.u64.compose %v256, %v251
    %v261 = vextract.low.u32 %v260
    %v262 = vextract.high.u32 %v260
    %v263 = vmul.u32 %v256, %v247
    %v264 = vadd.s32 %v259, %v261
    %vm265 = vc.u32 %v259, %v261
    %v266 = vadd.s32 %v262, 1
    %v267 = vsel %vm265, %v266, %v262
    %v268 = vadd.s32 %v263, %v267
    %v269 = vadd.s32 %v268, 536870912
    %v270 = vshrl.u32 %v269, 30
    %v271 = vshll.u32 %v270, 30
    %v272 = vsub.s32 %v268, %v271
    %vm273 = vcmp.lt.s32.totalorder %v272, 0
    %v274 = vsub.s32 0, %v272
    %v275 = vsel %vm273, %v274, %v272
    %v276 = vclz %v275
    %v277 = vsub.s32 %v276, 2
    %vm278 = vcmp.gt.s32.totalorder 0, %v277
    %v279 = vsel %vm278, 0, %v277
    %v280 = vsub.s32 32, %v279
    %v281 = vshll.u32 %v272, %v279
    %v282 = vshrl.u32 %v264, %v280
    %v283 = vor.u32 %v281, %v282
    %v284 = vsub.s32 4294967266, %v279
    %v285 = vadd.s32 %v284, 127
    %v286 = vshll.u32 %v285, 23
    %v287 = vor.u32 4788187, %v286
    %v288 = vand.u32 2147483647, %v287
    %v290 = vcvt.s32.f32 %v283
    %v291 = vmul.f32 %v290, %v288
    %v292 = vxor.u32 %v291, 2147483648
    %v293 = vsel %vm210, %v292, %v291
    %v294 = vsub.s32 4, %v270
    %v295 = vsel %vm210, %v294, %v270
    %v296 = vsel %vm209, %v104, %v293
    %v297 = vsel %vm209, 0, %v295
    %v298 = vcosq.f32.pop %v296
    %v299 = vsinq.f32.pop %v296
    %vm300 = vweird.f32 %v104
    %v301 = vand.u32 %v297, 3
    %vm302 = vcmp.lt.s32.totalorder %v301, 2
    %vm303 = vcmp.eq.s32.totalorder %v301, 0
    %v304 = vxor.u32 %v299, 2147483648
    %v305 = vsel %vm303, %v298, %v304
    %vm306 = vcmp.eq.s32.totalorder %v301, 2
    %v307 = vxor.u32 %v298, 2147483648
    %v308 = vsel %vm306, %v307, %v299
    %v309 = vsel %vm302, %v305, %v308
    %v310 = vsel %vm300, nan, %v309
    %v311 = vmul.f32 %v95, %v207
    %v312 = vmul.f32 %v102, %v310
    %313 = vst [vmem:[#allocation4] sm:$0xff] %v311
    %314 = vst [vmem:[#allocation4 + $0x8] sm:$0xff] %v312
    %v315 = vand.u32 2147483647, %v103
    %vm316 = vcmp.le.f32.partialorder %v315, 0.7853982
    %vm317 = vcmp.lt.s32.totalorder %v103, 0
    %v318 = vand.u32 %v103, 2139095040
    %v319 = vshrl.u32 %v318, 23
    %v320 = vsub.s32 %v319, 127
    %v321 = vand.u32 2147483647, %v103
    %v322 = vand.u32 %v321, 8388607
    %v323 = vor.u32 %v322, 8388608
    %v324 = vsub.s32 0, %v323
    %v325 = vadd.s32 %v320, 1
    %vm326 = vcmp.gt.s32.totalorder %v325, 0
    %v327 = vsel %vm326, %v325, 0
    %v328 = vshrl.u32 %v327, 5
    %v329 = vand.u32 %v327, 31
    %v330 = vsub.s32 32, %v329
    %v331 = vshrl.u32 683565275, %v330
    %v332 = vshll.u32 683565275, %v329
    %v333 = vshrl.u32 2475754826, %v330
    %v334 = vor.u32 %v332, %v333
    %v335 = vshll.u32 2475754826, %v329
    %v336 = vshrl.u32 2131351028, %v330
    %v337 = vor.u32 %v335, %v336
    %v338 = vshll.u32 2131351028, %v329
    %v339 = vshrl.u32 2102212464, %v330
    %v340 = vor.u32 %v338, %v339
    %v341 = vshll.u32 2102212464, %v329
    %v342 = vshrl.u32 920167782, %v330
    %v343 = vor.u32 %v341, %v342
    %v344 = vshll.u32 920167782, %v329
    %v345 = vshrl.u32 1326507024, %v330
    %v346 = vor.u32 %v344, %v345
    %vm347 = vcmp.lt.s32.totalorder %v328, 1
    %vm348 = vcmp.lt.s32.totalorder %v328, 2
    %vm349 = vcmp.lt.s32.totalorder %v328, 3
    %vm350 = vcmp.lt.s32.totalorder %v328, 4
    %v351 = vsel %vm347, %v331, %v334
    %v352 = vsel %vm350, %v340, 2102212464
    %v353 = vsel %vm349, %v337, %v352
    %v354 = vsel %vm348, %v351, %v353
    %v355 = vsel %vm347, %v334, %v337
    %v356 = vsel %vm350, %v343, 920167782
    %v357 = vsel %vm349, %v340, %v356
    %v358 = vsel %vm348, %v355, %v357
    %v359 = vsel %vm347, %v337, %v340
    %v360 = vsel %vm350, %v346, 1326507024
    %v361 = vsel %vm349, %v343, %v360
    %v362 = vsel %vm348, %v359, %v361
    %v363 = vshll.u32 %v323, 8
    %v364 = vmul.u32.u64.compose %v363, %v362
    %v365 = vextract.low.u32 %v364
    %v366 = vextract.high.u32 %v364
    %v367 = vmul.u32.u64.compose %v363, %v358
    %v368 = vextract.low.u32 %v367
    %v369 = vextract.high.u32 %v367
    %v370 = vmul.u32 %v363, %v354
    %v371 = vadd.s32 %v366, %v368
    %vm372 = vc.u32 %v366, %v368
    %v373 = vadd.s32 %v369, 1
    %v374 = vsel %vm372, %v373, %v369
    %v375 = vadd.s32 %v370, %v374
    %v376 = vadd.s32 %v375, 536870912
    %v377 = vshrl.u32 %v376, 30
    %v378 = vshll.u32 %v377, 30
    %v379 = vsub.s32 %v375, %v378
    %vm380 = vcmp.lt.s32.totalorder %v379, 0
    %v381 = vsub.s32 0, %v379
    %v382 = vsel %vm380, %v381, %v379
    %v383 = vclz %v382
    %v384 = vsub.s32 %v383, 2
    %vm385 = vcmp.gt.s32.totalorder 0, %v384
    %v386 = vsel %vm385, 0, %v384
    %v387 = vsub.s32 32, %v386
    %v388 = vshll.u32 %v379, %v386
    %v389 = vshrl.u32 %v371, %v387
    %v390 = vor.u32 %v388, %v389
    %v391 = vsub.s32 4294967266, %v386
    %v392 = vadd.s32 %v391, 127
    %v393 = vshll.u32 %v392, 23
    %v394 = vor.u32 4788187, %v393
    %v395 = vand.u32 2147483647, %v394
    %v397 = vcvt.s32.f32 %v390
    %v398 = vmul.f32 %v397, %v395
    %v399 = vxor.u32 %v398, 2147483648
    %v400 = vsel %vm317, %v399, %v398
    %v401 = vsub.s32 4, %v377
    %v402 = vsel %vm317, %v401, %v377
    %v403 = vsel %vm316, %v103, %v400
    %v404 = vsel %vm316, 0, %v402
    %v405 = vcosq.f32.pop %v403
    %v406 = vsinq.f32.pop %v403
    %vm407 = vweird.f32 %v103
    %v408 = vadd.s32 %v404, 3
    %v409 = vand.u32 %v408, 3
    %vm410 = vcmp.lt.s32.totalorder %v409, 2
    %vm411 = vcmp.eq.s32.totalorder %v409, 0
    %v412 = vxor.u32 %v406, 2147483648
    %v413 = vsel %vm411, %v405, %v412
    %vm414 = vcmp.eq.s32.totalorder %v409, 2
    %v415 = vxor.u32 %v405, 2147483648
    %v416 = vsel %vm414, %v415, %v406
    %v417 = vsel %vm410, %v413, %v416
    %v418 = vsel %vm407, nan, %v417
    %v419 = vand.u32 2147483647, %v104
    %vm420 = vcmp.le.f32.partialorder %v419, 0.7853982
    %vm421 = vcmp.lt.s32.totalorder %v104, 0
    %v422 = vand.u32 %v104, 2139095040
    %v423 = vshrl.u32 %v422, 23
    %v424 = vsub.s32 %v423, 127
    %v425 = vand.u32 2147483647, %v104
    %v426 = vand.u32 %v425, 8388607
    %v427 = vor.u32 %v426, 8388608
    %v428 = vsub.s32 0, %v427
    %v429 = vadd.s32 %v424, 1
    %vm430 = vcmp.gt.s32.totalorder %v429, 0
    %v431 = vsel %vm430, %v429, 0
    %v432 = vshrl.u32 %v431, 5
    %v433 = vand.u32 %v431, 31
    %v434 = vsub.s32 32, %v433
    %v435 = vshrl.u32 683565275, %v434
    %v436 = vshll.u32 683565275, %v433
    %v437 = vshrl.u32 2475754826, %v434
    %v438 = vor.u32 %v436, %v437
    %v439 = vshll.u32 2475754826, %v433
    %v440 = vshrl.u32 2131351028, %v434
    %v441 = vor.u32 %v439, %v440
    %v442 = vshll.u32 2131351028, %v433
    %v443 = vshrl.u32 2102212464, %v434
    %v444 = vor.u32 %v442, %v443
    %v445 = vshll.u32 2102212464, %v433
    %v446 = vshrl.u32 920167782, %v434
    %v447 = vor.u32 %v445, %v446
    %v448 = vshll.u32 920167782, %v433
    %v449 = vshrl.u32 1326507024, %v434
    %v450 = vor.u32 %v448, %v449
    %vm451 = vcmp.lt.s32.totalorder %v432, 1
    %vm452 = vcmp.lt.s32.totalorder %v432, 2
    %vm453 = vcmp.lt.s32.totalorder %v432, 3
    %vm454 = vcmp.lt.s32.totalorder %v432, 4
    %v455 = vsel %vm451, %v435, %v438
    %v456 = vsel %vm454, %v444, 2102212464
    %v457 = vsel %vm453, %v441, %v456
    %v458 = vsel %vm452, %v455, %v457
    %v459 = vsel %vm451, %v438, %v441
    %v460 = vsel %vm454, %v447, 920167782
    %v461 = vsel %vm453, %v444, %v460
    %v462 = vsel %vm452, %v459, %v461
    %v463 = vsel %vm451, %v441, %v444
    %v464 = vsel %vm454, %v450, 1326507024
    %v465 = vsel %vm453, %v447, %v464
    %v466 = vsel %vm452, %v463, %v465
    %v467 = vshll.u32 %v427, 8
    %v468 = vmul.u32.u64.compose %v467, %v466
    %v469 = vextract.low.u32 %v468
    %v470 = vextract.high.u32 %v468
    %v471 = vmul.u32.u64.compose %v467, %v462
    %v472 = vextract.low.u32 %v471
    %v473 = vextract.high.u32 %v471
    %v474 = vmul.u32 %v467, %v458
    %v475 = vadd.s32 %v470, %v472
    %vm476 = vc.u32 %v470, %v472
    %v477 = vadd.s32 %v473, 1
    %v478 = vsel %vm476, %v477, %v473
    %v479 = vadd.s32 %v474, %v478
    %v480 = vadd.s32 %v479, 536870912
    %v481 = vshrl.u32 %v480, 30
    %v482 = vshll.u32 %v481, 30
    %v483 = vsub.s32 %v479, %v482
    %vm484 = vcmp.lt.s32.totalorder %v483, 0
    %v485 = vsub.s32 0, %v483
    %v486 = vsel %vm484, %v485, %v483
    %v487 = vclz %v486
    %v488 = vsub.s32 %v487, 2
    %vm489 = vcmp.gt.s32.totalorder 0, %v488
    %v490 = vsel %vm489, 0, %v488
    %v491 = vsub.s32 32, %v490
    %v492 = vshll.u32 %v483, %v490
    %v493 = vshrl.u32 %v475, %v491
    %v494 = vor.u32 %v492, %v493
    %v495 = vsub.s32 4294967266, %v490
    %v496 = vadd.s32 %v495, 127
    %v497 = vshll.u32 %v496, 23
    %v498 = vor.u32 4788187, %v497
    %v499 = vand.u32 2147483647, %v498
    %v501 = vcvt.s32.f32 %v494
    %v502 = vmul.f32 %v501, %v499
    %v503 = vxor.u32 %v502, 2147483648
    %v504 = vsel %vm421, %v503, %v502
    %v505 = vsub.s32 4, %v481
    %v506 = vsel %vm421, %v505, %v481
    %v507 = vsel %vm420, %v104, %v504
    %v508 = vsel %vm420, 0, %v506
    %v509 = vcosq.f32.pop %v507
    %v510 = vsinq.f32.pop %v507
    %vm511 = vweird.f32 %v104
    %v512 = vadd.s32 %v508, 3
    %v513 = vand.u32 %v512, 3
    %vm514 = vcmp.lt.s32.totalorder %v513, 2
    %vm515 = vcmp.eq.s32.totalorder %v513, 0
    %v516 = vxor.u32 %v510, 2147483648
    %v517 = vsel %vm515, %v509, %v516
    %vm518 = vcmp.eq.s32.totalorder %v513, 2
    %v519 = vxor.u32 %v509, 2147483648
    %v520 = vsel %vm518, %v519, %v510
    %v521 = vsel %vm514, %v517, %v520
    %v522 = vsel %vm511, nan, %v521
    %v523 = vmul.f32 %v95, %v418
    %v524 = vmul.f32 %v102, %v522
    %525 = vst [vmem:[#allocation4 + $0x10] sm:$0xff] %v523
    %526 = vst [vmem:[#allocation4 + $0x18] sm:$0xff] %v524
    // Predicated region
    $region2: #{tpu_custom_call.1} parent=1 // pred_check
      _
    $region3: #{tpu_custom_call.1} parent=1 // pred_check_branch
      %528 = sbr.rel (0) target = $region5
    $region4: #{tpu_custom_call.1} parent=1 // pred_region
      %s530 = ssub.s32 512, 512
      %531 = vsyncadd [#allocation5], %s530
      %s532 = sshll.u32 [#allocation4], 4
      %s533 = int_to_ptr.vmem [resolvable:$true] %s532
      %538 = dma.vmem_to_hbm [thread:$0]  %s533, 512, %s1, [#allocation5], 128, 128, 8
    $region5: #{tpu_custom_call.1} parent=1 // pred_fallthru
      _
    // Predicated region
    $region6: #{tpu_custom_call.1} parent=1 // pred_check
      _
    $region7: #{tpu_custom_call.1} parent=1 // pred_check_branch
      %540 = sbr.rel (0) target = $region9
    $region8: #{tpu_custom_call.1} parent=1 // pred_region
      %541 = dma.done [#allocation5], 512
    $region9: #{tpu_custom_call.1} parent=1 // pred_fallthru
      _
    %542 = vsyncpa [#allocation5], 1

</llo_original>
